<compile_context>
chip_gen: v7x
topology: tpu7x:2x2x1
jax: 0.10.0
libtpu: 0.0.40
codegen_flags: <defaults>
</compile_context>

<pallas_src>
import math
from functools import partial

import jax
import jax.numpy as jnp
import numpy as np
from jax.experimental import pallas as pl
from jax.experimental.pallas import tpu as pltpu

LANE = 128
SUBLANE = 8


def _round_up(x, m):
    return (x + m - 1) // m * m


def _vmem_limit_bytes():
    # Raise the scoped-VMEM limit where the chip can be queried; otherwise fall back to
    # the compiler default (fine for the small self-test shapes).
    try:
        cap = int(pltpu.get_tpu_info().vmem_capacity_bytes)
        return int(min(48 * 1024 * 1024, (cap * 3) // 5))
    except Exception:
        return None


_VMEM_LIMIT = _vmem_limit_bytes()


def _cparams(*semantics):
    return pltpu.CompilerParams(dimension_semantics=tuple(semantics),
                                vmem_limit_bytes=_VMEM_LIMIT)


# ----------------------------------------------------------------------------
# L2Norm (channel-wise) on NHWC features
# ----------------------------------------------------------------------------
def _l2norm_kernel(eps, x_ref, w_ref, o_ref):
    x = x_ref[0]                                      # (THW, C) fp32
    ss = jnp.sum(x * x, axis=1, keepdims=True)        # (THW, 1)
    inv = 1.0 / (jnp.sqrt(ss) + eps)                  # tiny divide on (THW, 1)
    o_ref[0] = x * inv * w_ref[...]                   # broadcast (1, C)


def l2norm_nhwc(x_nhwc, weight, eps=1e-10, hw_tile=512):
    N, H, W, C = x_nhwc.shape
    HW = H * W
    xf = x_nhwc.reshape(N, HW, C).astype(jnp.float32)
    THW = min(hw_tile, _round_up(HW, SUBLANE))
    HWp = _round_up(HW, THW)
    if HWp != HW:
        xf = jnp.pad(xf, ((0, 0), (0, HWp - HW), (0, 0)))
    out = pl.pallas_call(
        partial(_l2norm_kernel, eps),
        out_shape=jax.ShapeDtypeStruct((N, HWp, C), jnp.float32),
        grid=(N, HWp // THW),
        in_specs=[
            pl.BlockSpec((1, THW, C), lambda n, t: (n, t, 0)),
            pl.BlockSpec((1, C), lambda n, t: (0, 0)),
        ],
        out_specs=pl.BlockSpec((1, THW, C), lambda n, t: (n, t, 0)),
        compiler_params=_cparams("parallel", "parallel"),
    )(xf, weight.reshape(1, C).astype(jnp.float32))
    return out[:, :HW, :].reshape(N, H, W, C)


# ----------------------------------------------------------------------------
# Generic tiled matmul + bias (+ReLU)  — used for 1x1 convs and im2col convs
# ----------------------------------------------------------------------------
def _matmul_bias_kernel(relu, p_ref, w_ref, b_ref, o_ref):
    acc = jnp.dot(p_ref[...], w_ref[...], preferred_element_type=jnp.float32)
    acc = acc + b_ref[...]
    if relu:
        acc = jnp.maximum(acc, 0.0)
    o_ref[...] = acc.astype(o_ref.dtype)


def matmul_bias(patches, w, b, relu, tp=512):
    """patches: (P, Kd), w: (Kd, Cout), b: (Cout,) -> (P, Cout) fp32."""
    Ptot, Kd = patches.shape
    Cout = w.shape[1]
    Cout_p = _round_up(Cout, LANE)
    TP = min(tp, _round_up(Ptot, SUBLANE))
    Pp = _round_up(Ptot, TP)

    patches = patches.astype(jnp.bfloat16)
    w = w.astype(jnp.bfloat16)
    b = b.astype(jnp.float32)
    if Pp != Ptot:
        patches = jnp.pad(patches, ((0, Pp - Ptot), (0, 0)))
    if Cout_p != Cout:
        w = jnp.pad(w, ((0, 0), (0, Cout_p - Cout)))
        b = jnp.pad(b, ((0, Cout_p - Cout),))

    out = pl.pallas_call(
        partial(_matmul_bias_kernel, relu),
        out_shape=jax.ShapeDtypeStruct((Pp, Cout_p), jnp.float32),
        grid=(Pp // TP,),
        in_specs=[
            pl.BlockSpec((TP, Kd), lambda i: (i, 0)),
            pl.BlockSpec((Kd, Cout_p), lambda i: (0, 0)),
            pl.BlockSpec((1, Cout_p), lambda i: (0, 0)),
        ],
        out_specs=pl.BlockSpec((TP, Cout_p), lambda i: (i, 0)),
        compiler_params=_cparams("parallel"),
        cost_estimate=pl.CostEstimate(
            flops=2 * Pp * Kd * Cout_p,
            transcendentals=0,
            bytes_accessed=Pp * Kd * 2 + Kd * Cout_p * 2 + Pp * Cout_p * 4),
    )(patches, w, b.reshape(1, Cout_p))
    return out[:Ptot, :Cout]


# ----------------------------------------------------------------------------
# 3x3 / stride-1 / pad-1 conv (SSD head) — row-shift accumulation, no 9x im2col
# ----------------------------------------------------------------------------
def _conv3x3_kernel(relu, tr, wp, x_ref, w_ref, b_ref, o_ref):
    # x_ref: (1, (Hp+2)*Wp, 3*Cin) bf16 (whole padded image, resident across row tiles)
    # w_ref: (3, 3*Cin, Cout_p) bf16 ; b_ref: (1, Cout_p) f32
    r = pl.program_id(1)
    row0 = r * tr
    acc = None
    for kh in range(3):
        start = pl.multiple_of((row0 + kh) * wp, SUBLANE)   # Wp is a multiple of 8
        slab = x_ref[0, pl.ds(start, tr * wp), :]            # (tr*wp, 3*Cin)
        part = jnp.dot(slab, w_ref[kh], preferred_element_type=jnp.float32)
        acc = part if acc is None else acc + part
    acc = acc + b_ref[...]
    if relu:
        acc = jnp.maximum(acc, 0.0)
    o_ref[0] = acc.astype(o_ref.dtype)


def conv3x3_s1p1(x_nhwc, w, b, relu=False, row_target=512):
    """3x3 stride-1 pad-1 conv, NHWC in -> NHWC out (fp32). w: (Cout, Cin, 3, 3)."""
    N, H, W, Cin = x_nhwc.shape
    Cout = w.shape[0]
    Wp = _round_up(W, SUBLANE)
    TR = max(1, min(H, max(SUBLANE, row_target) // Wp))
    Hp = _round_up(H, TR)
    R = Hp // TR
    Cout_p = _round_up(Cout, LANE)

    # zero-pad: 1 top/left conv halo + extra rows/cols so (Hp, Wp) tile cleanly
    xp = jnp.pad(x_nhwc.astype(jnp.bfloat16),
                 ((0, 0), (1, Hp - H + 1), (1, Wp - W + 1), (0, 0)))
    # kw-stack (3x expansion, channel-fastest within each kw) -> only kh shifts in-kernel
    xs = jnp.concatenate([xp[:, :, 0:Wp, :], xp[:, :, 1:Wp + 1, :], xp[:, :, 2:Wp + 2, :]],
                         axis=-1)                             # (N, Hp+2, Wp, 3*Cin)
    xflat = xs.reshape(N, (Hp + 2) * Wp, 3 * Cin)

    # weights: (kh, kw, cin, cout) -> (3, 3*Cin, Cout_p); order matches the kw-stack
    wt = jnp.transpose(w, (2, 3, 1, 0)).reshape(3, 3 * Cin, Cout)
    wt = jnp.pad(wt, ((0, 0), (0, 0), (0, Cout_p - Cout))).astype(jnp.bfloat16)
    bp = jnp.pad(b, ((0, Cout_p - Cout),)).astype(jnp.float32).reshape(1, Cout_p)

    out = pl.pallas_call(
        partial(_conv3x3_kernel, relu, TR, Wp),
        out_shape=jax.ShapeDtypeStruct((N, Hp * Wp, Cout_p), jnp.float32),
        grid=(N, R),
        in_specs=[
            pl.BlockSpec((1, (Hp + 2) * Wp, 3 * Cin), lambda n, r: (n, 0, 0)),
            pl.BlockSpec((3, 3 * Cin, Cout_p), lambda n, r: (0, 0, 0)),
            pl.BlockSpec((1, Cout_p), lambda n, r: (0, 0)),
        ],
        out_specs=pl.BlockSpec((1, TR * Wp, Cout_p), lambda n, r: (n, r, 0)),
        compiler_params=_cparams("parallel", "parallel"),
        cost_estimate=pl.CostEstimate(
            flops=2 * N * Hp * Wp * 9 * Cin * Cout_p,
            transcendentals=0,
            bytes_accessed=N * (Hp + 2) * Wp * 3 * Cin * 2
            + 3 * 3 * Cin * Cout_p * 2 + N * Hp * Wp * Cout_p * 4),
    )(xflat, wt, bp)
    return out.reshape(N, Hp, Wp, Cout_p)[:, :H, :W, :Cout]


# ----------------------------------------------------------------------------
# Conv dispatch (NHWC), generic path uses im2col + tiled matmul
# ----------------------------------------------------------------------------
def _im2col_nhwc(x, K, stride, padding):
    N, H, W, C = x.shape
    xp = jnp.pad(x, ((0, 0), (padding, padding), (padding, padding), (0, 0)))
    Ho = (H + 2 * padding - K) // stride + 1
    Wo = (W + 2 * padding - K) // stride + 1
    cols = []
    for kh in range(K):
        for kw in range(K):
            cols.append(xp[:, kh:kh + stride * Ho:stride, kw:kw + stride * Wo:stride, :])
    patches = jnp.concatenate(cols, axis=-1)          # (N, Ho, Wo, K*K*C), (kh,kw,c) order
    return patches.reshape(N * Ho * Wo, K * K * C), Ho, Wo


def conv2d_nhwc(x_nhwc, w, b, stride=1, padding=0, relu=False):
    """PyTorch-layout weights (Cout, Cin, K, K); NHWC in/out."""
    Cout, Cin, K, _ = w.shape
    N, H, W, _ = x_nhwc.shape
    if K == 3 and stride == 1 and padding == 1:
        return conv3x3_s1p1(x_nhwc, w, b, relu=relu)
    if K == 1 and padding == 0:
        xs = x_nhwc[:, ::stride, ::stride, :]
        _, Ho, Wo, _ = xs.shape
        wf = w.reshape(Cout, Cin).T
        out = matmul_bias(xs.reshape(N * Ho * Wo, Cin), wf, b, relu)
        return out.reshape(N, Ho, Wo, Cout)
    patches, Ho, Wo = _im2col_nhwc(x_nhwc, K, stride, padding)
    wf = jnp.transpose(w, (2, 3, 1, 0)).reshape(K * K * Cin, Cout)
    out = matmul_bias(patches, wf, b, relu)
    return out.reshape(N, Ho, Wo, Cout)


# ----------------------------------------------------------------------------
# Parameter construction (xavier_uniform like the module's init)
# ----------------------------------------------------------------------------
def xavier_uniform(key, cout, cin, k):
    fan_in = cin * k * k
    fan_out = cout * k * k
    bound = math.sqrt(6.0 / (fan_in + fan_out))
    return jax.random.uniform(key, (cout, cin, k, k), jnp.float32, -bound, bound)


def build_params(key, feature_channels, extra_arch, aspect_ratios, num_classes,
                 l2norm_scale=20.0):
    params = {}
    keys = iter(jax.random.split(key, 64))

    params["l2norm_w"] = jnp.full((feature_channels[0],), l2norm_scale, jnp.float32)

    # extra layers: replicate SSD._make_extra_layers
    in_c = feature_channels[-1]
    extra = []
    flag = False
    for idx, v in enumerate(extra_arch):
        if in_c != "S":
            if v == "S":
                k = (1, 3)[flag]
                extra.append(dict(cout=extra_arch[idx + 1], cin=in_c, k=k,
                                  stride=2, padding=1))
            else:
                k = (1, 3)[flag]
                extra.append(dict(cout=v, cin=in_c, k=k, stride=1, padding=0))
            flag = not flag
        in_c = v
    params["extra"] = []
    for lyr in extra:
        w = xavier_uniform(next(keys), lyr["cout"], lyr["cin"], lyr["k"])
        b = jnp.zeros((lyr["cout"],), jnp.float32)
        params["extra"].append(dict(w=w, b=b, stride=lyr["stride"], padding=lyr["padding"]))

    extra_channels = [c for c in extra_arch if isinstance(c, int)][1::2]
    head_channels = list(feature_channels) + list(extra_channels)
    mbox = [(len(a) + 1) * 2 for a in aspect_ratios]
    params["head_cls"], params["head_bbox"] = [], []
    for c, m in zip(head_channels, mbox):
        wc = xavier_uniform(next(keys), m * (num_classes + 1), c, 3)
        bc = jnp.zeros((m * (num_classes + 1),), jnp.float32)
        wl = xavier_uniform(next(keys), m * 4, c, 3)
        bl = jnp.zeros((m * 4,), jnp.float32)
        params["head_cls"].append(dict(w=wc, b=bc))
        params["head_bbox"].append(dict(w=wl, b=bl))
    return params, mbox


# ----------------------------------------------------------------------------
# SSD forward (the portion driven by the module itself)
# ----------------------------------------------------------------------------
def ssd_forward(params, features_nchw, num_classes):
    """features_nchw: list of NCHW fp32 backbone outputs."""
    feats = [jnp.transpose(f, (0, 2, 3, 1)) for f in features_nchw]   # NHWC
    feats[0] = l2norm_nhwc(feats[0], params["l2norm_w"])

    x = feats[-1]
    for idx, lyr in enumerate(params["extra"]):
        x = conv2d_nhwc(x, lyr["w"], lyr["b"], stride=lyr["stride"],
                        padding=lyr["padding"], relu=True)
        if idx % 2 == 1:
            feats.append(x)

    conf_pred, loc_pred = [], []
    for feat, cls_p, box_p in zip(feats, params["head_cls"], params["head_bbox"]):
        N, H, W, _ = feat.shape
        # fuse cls + bbox 3x3 convs into one kernel call (patches read once)
        w_f = jnp.concatenate([cls_p["w"], box_p["w"]], axis=0)
        b_f = jnp.concatenate([cls_p["b"], box_p["b"]], axis=0)
        out = conv3x3_s1p1(feat, w_f, b_f, relu=False)          # (N, H, W, Ccls+Cbox)
        ccls = cls_p["w"].shape[0]
        conf_pred.append(out[..., :ccls].reshape(N, -1, num_classes + 1))
        loc_pred.append(out[..., ccls:].reshape(N, -1, 4))
    return conf_pred, loc_pred


# ----------------------------------------------------------------------------
# Pure-JAX reference (same bf16 matmul numerics, fp32 accumulate)
# ----------------------------------------------------------------------------
def conv_ref(x, w, b, stride, padding):
    out = jax.lax.conv_general_dilated(
        x.astype(jnp.bfloat16), w.astype(jnp.bfloat16),
        window_strides=(stride, stride),
        padding=[(padding, padding), (padding, padding)],
        dimension_numbers=("NCHW", "OIHW", "NCHW"),
        preferred_element_type=jnp.float32)
    return out + b[None, :, None, None].astype(jnp.float32)


def ssd_forward_ref(params, features, num_classes, eps=1e-10):
    features = list(features)
    f0 = features[0].astype(jnp.float32)
    norm = jnp.sqrt(jnp.sum(f0 * f0, axis=1, keepdims=True)) + eps
    features[0] = params["l2norm_w"][None, :, None, None] * f0 / norm
    x = features[-1]
    for idx, lyr in enumerate(params["extra"]):
        x = jnp.maximum(conv_ref(x, lyr["w"], lyr["b"], lyr["stride"], lyr["padding"]), 0.0)
        if idx % 2 == 1:
            features.append(x)
    conf_pred, loc_pred = [], []
    for feat, cls_p, box_p in zip(features, params["head_cls"], params["head_bbox"]):
        N = feat.shape[0]
        c = conv_ref(feat, cls_p["w"], cls_p["b"], 1, 1)
        l = conv_ref(feat, box_p["w"], box_p["b"], 1, 1)
        conf_pred.append(jnp.transpose(c, (0, 2, 3, 1)).reshape(N, -1, num_classes + 1))
        loc_pred.append(jnp.transpose(l, (0, 2, 3, 1)).reshape(N, -1, 4))
    return conf_pred, loc_pred


# ----------------------------------------------------------------------------
if __name__ == "__main__":
    key = jax.random.PRNGKey(0)
    k_feat0, k_feat1, k_params = jax.random.split(key, 3)

    # Small synthetic "backbone" features (stand-in for conv4_3 / fc7 outputs).
    batch = 2
    feature_channels = [64, 128]
    features = [
        jax.random.normal(k_feat0, (batch, 64, 16, 16), jnp.float32),
        jax.random.normal(k_feat1, (batch, 128, 8, 8), jnp.float32),
    ]

    # Small SSD config: 2 backbone levels + 1 extra level, 8 classes.
    extra_arch = [64, "S", 32]                  # conv1x1(128->64), conv3x3 s2 p1 (64->32)
    aspect_ratios = [[2], [2, 3], [2]]          # -> mbox = [4, 6, 4]
    num_classes = 8

    params, mbox = build_params(k_params, feature_channels, extra_arch,
                                aspect_ratios, num_classes)

    conf_pred, loc_pred = ssd_forward(params, features, num_classes)
    jax.block_until_ready(conf_pred)
    jax.block_until_ready(loc_pred)

    # Correctness check against a pure-JAX reference using the same bf16/f32 numerics.
    conf_ref, loc_ref = ssd_forward_ref(params, features, num_classes)
    for a, r in zip(conf_pred, conf_ref):
        np.testing.assert_allclose(np.asarray(a), np.asarray(r), rtol=1e-2, atol=1e-2)
    for a, r in zip(loc_pred, loc_ref):
        np.testing.assert_allclose(np.asarray(a), np.asarray(r), rtol=1e-2, atol=1e-2)

    # Shape sanity: conf (N, Hi*Wi*Di, C+1), loc (N, Hi*Wi*Di, 4)
    expected_spatial = [(16, 16), (8, 8), (4, 4)]
    for (h, w), m, c, l in zip(expected_spatial, mbox, conf_pred, loc_pred):
        assert c.shape == (batch, h * w * m, num_classes + 1), c.shape
        assert l.shape == (batch, h * w * m, 4), l.shape

    print("KERNEL_OK")
</pallas_src>

<mosaic_0001>
module attributes {stable_mosaic.version = 11 : i64} {
  func.func @_l2norm_kernel(%arg0: i32, %arg1: i32, %arg2: memref<1x256x64xf32, #tpu.memory_space<vmem>>, %arg3: memref<1x64xf32, #tpu.memory_space<vmem>>, %arg4: memref<1x256x64xf32, #tpu.memory_space<vmem>>) attributes {dimension_semantics = [#tpu.dimension_semantics<parallel>, #tpu.dimension_semantics<parallel>], iteration_bounds = array<i64: 2, 1>, scalar_prefetch = 0 : i64, scratch_operands = 0 : i64, tpu.core_type = #tpu.core_type<tc>, window_params = [{transform_indices = @transform_0, window_bounds = array<i64: 1, 256, 64>}, {pipeline_mode = #tpu.pipeline_mode<synchronous>, transform_indices = @transform_1, window_bounds = array<i64: 1, 64>}, {transform_indices = @transform_2, window_bounds = array<i64: 1, 256, 64>}]} {
    %c0 = arith.constant 0 : index
    %c0_0 = arith.constant 0 : index
    %c0_1 = arith.constant 0 : index
    %0 = vector.load %arg2[%c0, %c0_0, %c0_1] : memref<1x256x64xf32, #tpu.memory_space<vmem>>, vector<1x256x64xf32>
    %1 = vector.shape_cast %0 : vector<1x256x64xf32> to vector<256x64xf32>
    %2 = arith.mulf %1, %1 : vector<256x64xf32>
    %cst = arith.constant dense<0.000000e+00> : vector<256xf32>
    %3 = vector.multi_reduction <add>, %2, %cst [1] : vector<256x64xf32> to vector<256xf32>
    %4 = vector.shape_cast %3 : vector<256xf32> to vector<256x1xf32>
    %5 = math.sqrt %4 : vector<256x1xf32>
    %cst_2 = arith.constant 1.000000e-10 : f32
    %6 = vector.broadcast %cst_2 : f32 to vector<256x1xf32>
    %7 = arith.addf %5, %6 : vector<256x1xf32>
    %cst_3 = arith.constant 1.000000e+00 : f32
    %8 = vector.broadcast %cst_3 : f32 to vector<256x1xf32>
    %9 = arith.divf %8, %7 : vector<256x1xf32>
    %10 = vector.broadcast %9 : vector<256x1xf32> to vector<256x64xf32>
    %11 = arith.mulf %1, %10 : vector<256x64xf32>
    %c0_4 = arith.constant 0 : index
    %c0_5 = arith.constant 0 : index
    %12 = vector.load %arg3[%c0_4, %c0_5] : memref<1x64xf32, #tpu.memory_space<vmem>>, vector<1x64xf32>
    %13 = vector.broadcast %12 : vector<1x64xf32> to vector<256x64xf32>
    %14 = arith.mulf %11, %13 : vector<256x64xf32>
    %c0_6 = arith.constant 0 : index
    %c0_7 = arith.constant 0 : index
    %c0_8 = arith.constant 0 : index
    %15 = vector.load %arg4[%c0_6, %c0_7, %c0_8] : memref<1x256x64xf32, #tpu.memory_space<vmem>>, vector<1x256x64xf32>
    %16 = vector.shape_cast %15 : vector<1x256x64xf32> to vector<256x64xf32>
    %17 = vector.shape_cast %14 : vector<256x64xf32> to vector<1x256x64xf32>
    tpu.vector_store %arg4[%c0_6, %c0_7, %c0_8], %17 {strides = array<i32>} : memref<1x256x64xf32, #tpu.memory_space<vmem>>, vector<1x256x64xf32>,
    return
  }
  func.func @transform_0(%arg0: i32, %arg1: i32) -> (i32, i32, i32) {
    %c0_i32 = arith.constant 0 : i32
    %c0_i32_0 = arith.constant 0 : i32
    return %arg0, %arg1, %c0_i32 : i32, i32, i32
  }
  func.func @transform_1(%arg0: i32, %arg1: i32) -> (i32, i32) {
    %c0_i32 = arith.constant 0 : i32
    %c0_i32_0 = arith.constant 0 : i32
    %c0_i32_1 = arith.constant 0 : i32
    return %c0_i32, %c0_i32_0 : i32, i32
  }
  func.func @transform_2(%arg0: i32, %arg1: i32) -> (i32, i32, i32) {
    %c0_i32 = arith.constant 0 : i32
    %c0_i32_0 = arith.constant 0 : i32
    return %arg0, %arg1, %c0_i32 : i32, i32, i32
  }
}

</mosaic_0001>

<llo_original>
// kernel: tpu_custom_call.1
$region0: #{tpu_custom_call.1}
  #allocation0 [shape = 'u32[]', space=smem, size = 0x4, offset = 0x4, fixed_abs, tag = 'smem constant byte address 0x4 - core index']
  #allocation1 [shape = 'u32[144,128]{1,0:T(1,128)}', space=vmem, size = 0x12000, scoped, tag = 'internal scratch']
  %s0 = inlined_call_operand.vmem [shape: f32[2,256,64], index: 0, kind: input, shape index: {}]
  %s1 = inlined_call_operand.vmem [shape: f32[1,64], index: 1, kind: input, shape index: {}]
  %s2 = inlined_call_operand.vmem [shape: f32[2,256,64], index: 2, kind: output, shape index: {}]
  %s3 = sld [smem:[#allocation0]]
  $region41: #{tpu_custom_call.1} parent=0
    _
  %s5 = ssub.s32 1, %s3
  %s6 = scalar_select 0, %s5, %s3
  loop: start=0, step=1, limit=4
  $region2: #{tpu_custom_call.1} parent=0 // loop_pre_header
    _
  $region3: #{tpu_custom_call.1} parent=0 // loop_header
    %s8 = sphi 0, %s12
    %p9 = scmp.ge.s32.totalorder %s8, 4
    %s15 = sphi 0, %s27
    %s16 = sphi 0, %s23
    %s17 = sphi 0, %s15
    %s18 = sphi 0, %s16
    %s19 = sphi 0, %s17
    %s20 = sphi 0, %s18
    %s32 = sphi 0, %s34
    %s35 = sphi 0, %s32
    %s36 = sphi 0, %s35
    %s52 = sphi 0, %s36
    %s56 = sphi 0, %s56
    %s58 = sphi 0, %s56
    %s59 = sphi 0, %s58
    %s73 = sphi 0, %s59
    %s81 = sphi 0, %s83
    %s84 = sphi 0, %s81
    %s85 = sphi 0, %s84
    %s101 = sphi 0, %s85
  $region4: #{tpu_custom_call.1} parent=0 // loop_header_branch
    %11 = sbr.rel (%p9) target = $region8
  $region5: #{tpu_custom_call.1} parent=0 // loop_body
    %s13 = ssub.s32 %s8, 1
    %s14 = ssub.s32 %s8, 2
    %s21 = sadd.s32 1, %s16
    %p22 = scmp.ge.s32.totalorder %s21, 1
    %s23 = scalar_select %p22, 0, %s21
    %s24 = sadd.s32 1, %s15
    %s25 = scalar_select %p22, %s24, %s15
    %p26 = scmp.ge.s32.totalorder %s25, 2
    %s27 = scalar_select %p26, 0, %s25
    %s28 = ssub.s32 %s15, %s27
    %s29 = ssub.s32 %s16, %s23
    %s30 = sor.u32 %s28, %s29
    %p31 = scmp.eq.s32.totalorder %s30, 0
    %s33 = sadd.s32 %s32, 1
    %s34 = scalar_select %p31, %s32, %s33
    %p37 = pneg %p31
    %p38 = scmp.eq.s32.totalorder %s8, 1
    %p39 = por %p37, %p38
    %p40 = scmp.ne.s32.totalorder %s32, %s35
    %p41 = scmp.eq.s32.totalorder %s8, 0
    %p42 = por %p40, %p41
    %p43 = scmp.ne.s32.totalorder %s32, %s35
    %p44 = scmp.eq.s32.totalorder %s13, 1
    %p45 = por %p43, %p44
    %p46 = scmp.ne.s32.totalorder %s35, %s36
    %p47 = scmp.eq.s32.totalorder %s13, 0
    %p48 = por %p46, %p47
    %p49 = scmp.ne.s32.totalorder %s35, %s36
    %p50 = scmp.eq.s32.totalorder %s14, 1
    %p51 = por %p49, %p50
    %p53 = scmp.ne.s32.totalorder %s36, %s52
    %p54 = scmp.eq.s32.totalorder %s14, 0
    %p55 = por %p53, %p54
    %s57 = sadd.s32 %s56, 1
    %p60 = scmp.eq.s32.totalorder %s8, 1
    %p61 = scmp.ne.s32.totalorder %s56, %s58
    %p62 = scmp.eq.s32.totalorder %s8, 0
    %p63 = por %p61, %p62
    %p64 = scmp.ne.s32.totalorder %s56, %s58
    %p65 = scmp.eq.s32.totalorder %s13, 1
    %p66 = por %p64, %p65
    %p67 = scmp.ne.s32.totalorder %s58, %s59
    %p68 = scmp.eq.s32.totalorder %s13, 0
    %p69 = por %p67, %p68
    %p70 = scmp.ne.s32.totalorder %s58, %s59
    %p71 = scmp.eq.s32.totalorder %s14, 1
    %p72 = por %p70, %p71
    %p74 = scmp.ne.s32.totalorder %s59, %s73
    %p75 = scmp.eq.s32.totalorder %s14, 0
    %p76 = por %p74, %p75
    %s77 = ssub.s32 %s15, %s27
    %s78 = ssub.s32 %s16, %s23
    %s79 = sor.u32 %s77, %s78
    %p80 = scmp.eq.s32.totalorder %s79, 0
    %s82 = sadd.s32 %s81, 1
    %s83 = scalar_select %p80, %s81, %s82
    %p86 = pneg %p80
    %p87 = scmp.eq.s32.totalorder %s8, 1
    %p88 = por %p86, %p87
    %p89 = scmp.ne.s32.totalorder %s81, %s84
    %p90 = scmp.eq.s32.totalorder %s8, 0
    %p91 = por %p89, %p90
    %p92 = scmp.ne.s32.totalorder %s81, %s84
    %p93 = scmp.eq.s32.totalorder %s13, 1
    %p94 = por %p92, %p93
    %p95 = scmp.ne.s32.totalorder %s84, %s85
    %p96 = scmp.eq.s32.totalorder %s13, 0
    %p97 = por %p95, %p96
    %p98 = scmp.ne.s32.totalorder %s84, %s85
    %p99 = scmp.eq.s32.totalorder %s14, 1
    %p100 = por %p98, %p99
    %p102 = scmp.ne.s32.totalorder %s85, %s101
    %p103 = scmp.eq.s32.totalorder %s14, 0
    %p104 = por %p102, %p103
    %p105 = scmp.le.s32.totalorder 1, %s8
    %p106 = scmp.lt.s32.totalorder %s8, 3
    %p107 = pnand %p105, %p106
    %p108 = pneg %p107
    // Predicated region
    $region9: #{tpu_custom_call.1} parent=5 // pred_check
      _
    $region10: #{tpu_custom_call.1} parent=5 // pred_check_branch
      %110 = sbr.rel (%p107) target = $region12
    $region11: #{tpu_custom_call.1} parent=5 // pred_region
      %s111 = ssub.s32 %s8, 1
      // Predicated region
      $region13: #{tpu_custom_call.1} parent=11 // pred_check
        %p112 = pneg %p69
      $region14: #{tpu_custom_call.1} parent=11 // pred_check_branch
        %114 = sbr.rel (%p112) target = $region16
      $region15: #{tpu_custom_call.1} parent=11 // pred_region
        _
      $region16: #{tpu_custom_call.1} parent=11 // pred_fallthru
        _
    $region12: #{tpu_custom_call.1} parent=5 // pred_fallthru
      _
    %p115 = scmp.lt.s32.totalorder %s8, 2
    // Predicated region
    $region17: #{tpu_custom_call.1} parent=5 // pred_check
      %p116 = pneg %p115
    $region18: #{tpu_custom_call.1} parent=5 // pred_check_branch
      %118 = sbr.rel (%p116) target = $region20
    $region19: #{tpu_custom_call.1} parent=5 // pred_region
      // Predicated region
      $region21: #{tpu_custom_call.1} parent=19 // pred_check
        %p119 = pneg %p42
      $region22: #{tpu_custom_call.1} parent=19 // pred_check_branch
        %121 = sbr.rel (%p119) target = $region24
      $region23: #{tpu_custom_call.1} parent=19 // pred_region
        %s122 = smul.u32 32, %s16
        %p123 = scmp.lt.s32.totalorder %s15, 1
        %s124 = scalar_select %p123, %s15, 1
        %p125 = scmp.lt.s32.totalorder %s122, 31
        %s126 = scalar_select %p125, %s122, 31
        %s127 = smul.addr %s124, 32
        %s128 = sadd.s32 %s126, %s127
        %s129 = smul.addr %s128, 8
        %s130 = scalar_lea.vmem %s0, %s129
        %s131 = smul.u32 32, %s16
      $region24: #{tpu_custom_call.1} parent=19 // pred_fallthru
        _
    $region20: #{tpu_custom_call.1} parent=5 // pred_fallthru
      _
    %p132 = scmp.le.s32.totalorder 1, %s8
    %p133 = scmp.lt.s32.totalorder %s8, 3
    %p134 = pnand %p132, %p133
    %p135 = pneg %p134
    // Predicated region
    $region25: #{tpu_custom_call.1} parent=5 // pred_check
      _
    $region26: #{tpu_custom_call.1} parent=5 // pred_check_branch
      %137 = sbr.rel (%p134) target = $region28
    $region27: #{tpu_custom_call.1} parent=5 // pred_region
      %s138 = ssub.s32 %s8, 1
      %s139 = smul.u32 32, %s18
      %p140 = scmp.lt.s32.totalorder %s17, 1
      %s141 = scalar_select %p140, %s17, 1
      %p142 = scmp.lt.s32.totalorder %s139, 31
      %s143 = scalar_select %p142, %s139, 31
      %s144 = smul.addr %s141, 32
      %s145 = sadd.s32 %s143, %s144
      %s146 = smul.addr %s145, 8
      %s147 = scalar_lea.vmem %s0, %s146
      %p148 = pneg %p48
      %p149 = pneg %p45
      %p150 = pneg %p69
      %p151 = pneg %p66
      %p152 = pneg %p97
      %p153 = pneg %p94
      %s154 = smul.u32 32, %s18
      %p155 = scmp.lt.s32.totalorder %s17, 1
      %s156 = scalar_select %p155, %s17, 1
      %p157 = scmp.lt.s32.totalorder %s154, 31
      %s158 = scalar_select %p157, %s154, 31
      %s159 = smul.addr %s156, 32
      %s160 = sadd.s32 %s158, %s159
      %s161 = smul.addr %s160, 8
      %s162 = scalar_lea.vmem %s2, %s161
      %s163 = smul.u32 32, %s18
      %p164 = scmp.lt.s32.totalorder %s17, 1
      %s165 = scalar_select %p164, %s17, 1
      %p166 = scmp.lt.s32.totalorder %s163, 31
      %s167 = scalar_select %p166, %s163, 31
      %s168 = smul.addr %s165, 32
      %s169 = sadd.s32 %s167, %s168
      %s170 = smul.addr %s169, 8
      %s171 = scalar_lea.vmem %s0, %s170
      %s172 = smul.u32 32, %s18
      %s173 = smul.u32 32, %s18
      %p174 = scmp.lt.s32.totalorder %s17, 1
      %s175 = scalar_select %p174, %s17, 1
      %p176 = scmp.lt.s32.totalorder %s173, 31
      %s177 = scalar_select %p176, %s173, 31
      %s178 = smul.addr %s175, 32
      %s179 = sadd.s32 %s177, %s178
      %s180 = smul.addr %s179, 8
      %s181 = scalar_lea.vmem %s2, %s180
      %s182 = smul.u32 32, %s18
      %v183 = vld [vmem:[%s171] sm:$0xff]
      %v184 = vld [vmem:[%s171 + $0x8] sm:$0xff]
      %v185 = vld [vmem:[%s171 + $0x10] sm:$0xff]
      %v186 = vld [vmem:[%s171 + $0x18] sm:$0xff]
      %v187 = vld [vmem:[%s171 + $0x20] sm:$0xff]
      %v188 = vld [vmem:[%s171 + $0x28] sm:$0xff]
      %v189 = vld [vmem:[%s171 + $0x30] sm:$0xff]
      %v190 = vld [vmem:[%s171 + $0x38] sm:$0xff]
      %v191 = vld [vmem:[%s171 + $0x40] sm:$0xff]
      %v192 = vld [vmem:[%s171 + $0x48] sm:$0xff]
      %v193 = vld [vmem:[%s171 + $0x50] sm:$0xff]
      %v194 = vld [vmem:[%s171 + $0x58] sm:$0xff]
      %v195 = vld [vmem:[%s171 + $0x60] sm:$0xff]
      %v196 = vld [vmem:[%s171 + $0x68] sm:$0xff]
      %v197 = vld [vmem:[%s171 + $0x70] sm:$0xff]
      %v198 = vld [vmem:[%s171 + $0x78] sm:$0xff]
      %v199 = vld [vmem:[%s171 + $0x80] sm:$0xff]
      %v200 = vld [vmem:[%s171 + $0x88] sm:$0xff]
      %v201 = vld [vmem:[%s171 + $0x90] sm:$0xff]
      %v202 = vld [vmem:[%s171 + $0x98] sm:$0xff]
      %v203 = vld [vmem:[%s171 + $0xa0] sm:$0xff]
      %v204 = vld [vmem:[%s171 + $0xa8] sm:$0xff]
      %v205 = vld [vmem:[%s171 + $0xb0] sm:$0xff]
      %v206 = vld [vmem:[%s171 + $0xb8] sm:$0xff]
      %v207 = vld [vmem:[%s171 + $0xc0] sm:$0xff]
      %v208 = vld [vmem:[%s171 + $0xc8] sm:$0xff]
      %v209 = vld [vmem:[%s171 + $0xd0] sm:$0xff]
      %v210 = vld [vmem:[%s171 + $0xd8] sm:$0xff]
      %v211 = vld [vmem:[%s171 + $0xe0] sm:$0xff]
      %v212 = vld [vmem:[%s171 + $0xe8] sm:$0xff]
      %v213 = vld [vmem:[%s171 + $0xf0] sm:$0xff]
      %v214 = vld [vmem:[%s171 + $0xf8] sm:$0xff]
      %v215 = vmul.f32 %v183, %v183
      %v216 = vmul.f32 %v184, %v184
      %v217 = vmul.f32 %v185, %v185
      %v218 = vmul.f32 %v186, %v186
      %v219 = vmul.f32 %v187, %v187
      %v220 = vmul.f32 %v188, %v188
      %v221 = vmul.f32 %v189, %v189
      %v222 = vmul.f32 %v190, %v190
      %v223 = vmul.f32 %v191, %v191
      %v224 = vmul.f32 %v192, %v192
      %v225 = vmul.f32 %v193, %v193
      %v226 = vmul.f32 %v194, %v194
      %v227 = vmul.f32 %v195, %v195
      %v228 = vmul.f32 %v196, %v196
      %v229 = vmul.f32 %v197, %v197
      %v230 = vmul.f32 %v198, %v198
      %v231 = vmul.f32 %v199, %v199
      %v232 = vmul.f32 %v200, %v200
      %v233 = vmul.f32 %v201, %v201
      %v234 = vmul.f32 %v202, %v202
      %v235 = vmul.f32 %v203, %v203
      %v236 = vmul.f32 %v204, %v204
      %v237 = vmul.f32 %v205, %v205
      %v238 = vmul.f32 %v206, %v206
      %v239 = vmul.f32 %v207, %v207
      %v240 = vmul.f32 %v208, %v208
      %v241 = vmul.f32 %v209, %v209
      %v242 = vmul.f32 %v210, %v210
      %v243 = vmul.f32 %v211, %v211
      %v244 = vmul.f32 %v212, %v212
      %v245 = vmul.f32 %v213, %v213
      %v246 = vmul.f32 %v214, %v214
      %vm247 = vcmask 523264
      %v248 = vsel %vm247, %v215, 0.0
      %249 = vadd.xlane.f32.xlu0 %v248
      %v250 = vpop.xlane.xlu0 %249
      %v251 = vsel %vm247, %v216, 0.0
      %252 = vadd.xlane.f32.xlu0 %v251
      %v253 = vpop.xlane.xlu0 %252
      %v254 = vsel %vm247, %v217, 0.0
      %255 = vadd.xlane.f32.xlu0 %v254
      %v256 = vpop.xlane.xlu0 %255
      %v257 = vsel %vm247, %v218, 0.0
      %258 = vadd.xlane.f32.xlu0 %v257
      %v259 = vpop.xlane.xlu0 %258
      %v260 = vsel %vm247, %v219, 0.0
      %261 = vadd.xlane.f32.xlu0 %v260
      %v262 = vpop.xlane.xlu0 %261
      %v263 = vsel %vm247, %v220, 0.0
      %264 = vadd.xlane.f32.xlu0 %v263
      %v265 = vpop.xlane.xlu0 %264
      %v266 = vsel %vm247, %v221, 0.0
      %267 = vadd.xlane.f32.xlu0 %v266
      %v268 = vpop.xlane.xlu0 %267
      %v269 = vsel %vm247, %v222, 0.0
      %270 = vadd.xlane.f32.xlu0 %v269
      %v271 = vpop.xlane.xlu0 %270
      %v272 = vsel %vm247, %v223, 0.0
      %273 = vadd.xlane.f32.xlu0 %v272
      %v274 = vpop.xlane.xlu0 %273
      %v275 = vsel %vm247, %v224, 0.0
      %276 = vadd.xlane.f32.xlu0 %v275
      %v277 = vpop.xlane.xlu0 %276
      %v278 = vsel %vm247, %v225, 0.0
      %279 = vadd.xlane.f32.xlu0 %v278
      %v280 = vpop.xlane.xlu0 %279
      %v281 = vsel %vm247, %v226, 0.0
      %282 = vadd.xlane.f32.xlu0 %v281
      %v283 = vpop.xlane.xlu0 %282
      %v284 = vsel %vm247, %v227, 0.0
      %285 = vadd.xlane.f32.xlu0 %v284
      %v286 = vpop.xlane.xlu0 %285
      %v287 = vsel %vm247, %v228, 0.0
      %288 = vadd.xlane.f32.xlu0 %v287
      %v289 = vpop.xlane.xlu0 %288
      %v290 = vsel %vm247, %v229, 0.0
      %291 = vadd.xlane.f32.xlu0 %v290
      %v292 = vpop.xlane.xlu0 %291
      %v293 = vsel %vm247, %v230, 0.0
      %294 = vadd.xlane.f32.xlu0 %v293
      %v295 = vpop.xlane.xlu0 %294
      %v296 = vsel %vm247, %v231, 0.0
      %297 = vadd.xlane.f32.xlu0 %v296
      %v298 = vpop.xlane.xlu0 %297
      %v299 = vsel %vm247, %v232, 0.0
      %300 = vadd.xlane.f32.xlu0 %v299
      %v301 = vpop.xlane.xlu0 %300
      %v302 = vsel %vm247, %v233, 0.0
      %303 = vadd.xlane.f32.xlu0 %v302
      %v304 = vpop.xlane.xlu0 %303
      %v305 = vsel %vm247, %v234, 0.0
      %306 = vadd.xlane.f32.xlu0 %v305
      %v307 = vpop.xlane.xlu0 %306
      %v308 = vsel %vm247, %v235, 0.0
      %309 = vadd.xlane.f32.xlu0 %v308
      %v310 = vpop.xlane.xlu0 %309
      %v311 = vsel %vm247, %v236, 0.0
      %312 = vadd.xlane.f32.xlu0 %v311
      %v313 = vpop.xlane.xlu0 %312
      %v314 = vsel %vm247, %v237, 0.0
      %315 = vadd.xlane.f32.xlu0 %v314
      %v316 = vpop.xlane.xlu0 %315
      %v317 = vsel %vm247, %v238, 0.0
      %318 = vadd.xlane.f32.xlu0 %v317
      %v319 = vpop.xlane.xlu0 %318
      %v320 = vsel %vm247, %v239, 0.0
      %321 = vadd.xlane.f32.xlu0 %v320
      %v322 = vpop.xlane.xlu0 %321
      %v323 = vsel %vm247, %v240, 0.0
      %324 = vadd.xlane.f32.xlu0 %v323
      %v325 = vpop.xlane.xlu0 %324
      %v326 = vsel %vm247, %v241, 0.0
      %327 = vadd.xlane.f32.xlu0 %v326
      %v328 = vpop.xlane.xlu0 %327
      %v329 = vsel %vm247, %v242, 0.0
      %330 = vadd.xlane.f32.xlu0 %v329
      %v331 = vpop.xlane.xlu0 %330
      %v332 = vsel %vm247, %v243, 0.0
      %333 = vadd.xlane.f32.xlu0 %v332
      %v334 = vpop.xlane.xlu0 %333
      %v335 = vsel %vm247, %v244, 0.0
      %336 = vadd.xlane.f32.xlu0 %v335
      %v337 = vpop.xlane.xlu0 %336
      %v338 = vsel %vm247, %v245, 0.0
      %339 = vadd.xlane.f32.xlu0 %v338
      %v340 = vpop.xlane.xlu0 %339
      %v341 = vsel %vm247, %v246, 0.0
      %342 = vadd.xlane.f32.xlu0 %v341
      %v343 = vpop.xlane.xlu0 %342
      %v344 = vrsqrt.pop %v250
      %v345 = vmul.f32 %v250, %v344
      %vm346 = vcmp.eq.f32.partialorder %v250, inf
      %v347 = vsel %vm346, %v250, %v345
      %vm348 = vcmp.eq.f32.partialorder %v250, 0.0
      %v349 = vand.u32 %v250, 2147483648
      %v350 = vsel %vm348, %v349, %v347
      %v351 = vrsqrt.pop %v253
      %v352 = vmul.f32 %v253, %v351
      %vm353 = vcmp.eq.f32.partialorder %v253, inf
      %v354 = vsel %vm353, %v253, %v352
      %vm355 = vcmp.eq.f32.partialorder %v253, 0.0
      %v356 = vand.u32 %v253, 2147483648
      %v357 = vsel %vm355, %v356, %v354
      %v358 = vrsqrt.pop %v256
      %v359 = vmul.f32 %v256, %v358
      %vm360 = vcmp.eq.f32.partialorder %v256, inf
      %v361 = vsel %vm360, %v256, %v359
      %vm362 = vcmp.eq.f32.partialorder %v256, 0.0
      %v363 = vand.u32 %v256, 2147483648
      %v364 = vsel %vm362, %v363, %v361
      %v365 = vrsqrt.pop %v259
      %v366 = vmul.f32 %v259, %v365
      %vm367 = vcmp.eq.f32.partialorder %v259, inf
      %v368 = vsel %vm367, %v259, %v366
      %vm369 = vcmp.eq.f32.partialorder %v259, 0.0
      %v370 = vand.u32 %v259, 2147483648
      %v371 = vsel %vm369, %v370, %v368
      %v372 = vrsqrt.pop %v262
      %v373 = vmul.f32 %v262, %v372
      %vm374 = vcmp.eq.f32.partialorder %v262, inf
      %v375 = vsel %vm374, %v262, %v373
      %vm376 = vcmp.eq.f32.partialorder %v262, 0.0
      %v377 = vand.u32 %v262, 2147483648
      %v378 = vsel %vm376, %v377, %v375
      %v379 = vrsqrt.pop %v265
      %v380 = vmul.f32 %v265, %v379
      %vm381 = vcmp.eq.f32.partialorder %v265, inf
      %v382 = vsel %vm381, %v265, %v380
      %vm383 = vcmp.eq.f32.partialorder %v265, 0.0
      %v384 = vand.u32 %v265, 2147483648
      %v385 = vsel %vm383, %v384, %v382
      %v386 = vrsqrt.pop %v268
      %v387 = vmul.f32 %v268, %v386
      %vm388 = vcmp.eq.f32.partialorder %v268, inf
      %v389 = vsel %vm388, %v268, %v387
      %vm390 = vcmp.eq.f32.partialorder %v268, 0.0
      %v391 = vand.u32 %v268, 2147483648
      %v392 = vsel %vm390, %v391, %v389
      %v393 = vrsqrt.pop %v271
      %v394 = vmul.f32 %v271, %v393
      %vm395 = vcmp.eq.f32.partialorder %v271, inf
      %v396 = vsel %vm395, %v271, %v394
      %vm397 = vcmp.eq.f32.partialorder %v271, 0.0
      %v398 = vand.u32 %v271, 2147483648
      %v399 = vsel %vm397, %v398, %v396
      %v400 = vrsqrt.pop %v274
      %v401 = vmul.f32 %v274, %v400
      %vm402 = vcmp.eq.f32.partialorder %v274, inf
      %v403 = vsel %vm402, %v274, %v401
      %vm404 = vcmp.eq.f32.partialorder %v274, 0.0
      %v405 = vand.u32 %v274, 2147483648
      %v406 = vsel %vm404, %v405, %v403
      %v407 = vrsqrt.pop %v277
      %v408 = vmul.f32 %v277, %v407
      %vm409 = vcmp.eq.f32.partialorder %v277, inf
      %v410 = vsel %vm409, %v277, %v408
      %vm411 = vcmp.eq.f32.partialorder %v277, 0.0
      %v412 = vand.u32 %v277, 2147483648
      %v413 = vsel %vm411, %v412, %v410
      %v414 = vrsqrt.pop %v280
      %v415 = vmul.f32 %v280, %v414
      %vm416 = vcmp.eq.f32.partialorder %v280, inf
      %v417 = vsel %vm416, %v280, %v415
      %vm418 = vcmp.eq.f32.partialorder %v280, 0.0
      %v419 = vand.u32 %v280, 2147483648
      %v420 = vsel %vm418, %v419, %v417
      %v421 = vrsqrt.pop %v283
      %v422 = vmul.f32 %v283, %v421
      %vm423 = vcmp.eq.f32.partialorder %v283, inf
      %v424 = vsel %vm423, %v283, %v422
      %vm425 = vcmp.eq.f32.partialorder %v283, 0.0
      %v426 = vand.u32 %v283, 2147483648
      %v427 = vsel %vm425, %v426, %v424
      %v428 = vrsqrt.pop %v286
      %v429 = vmul.f32 %v286, %v428
      %vm430 = vcmp.eq.f32.partialorder %v286, inf
      %v431 = vsel %vm430, %v286, %v429
      %vm432 = vcmp.eq.f32.partialorder %v286, 0.0
      %v433 = vand.u32 %v286, 2147483648
      %v434 = vsel %vm432, %v433, %v431
      %v435 = vrsqrt.pop %v289
      %v436 = vmul.f32 %v289, %v435
      %vm437 = vcmp.eq.f32.partialorder %v289, inf
      %v438 = vsel %vm437, %v289, %v436
      %vm439 = vcmp.eq.f32.partialorder %v289, 0.0
      %v440 = vand.u32 %v289, 2147483648
      %v441 = vsel %vm439, %v440, %v438
      %v442 = vrsqrt.pop %v292
      %v443 = vmul.f32 %v292, %v442
      %vm444 = vcmp.eq.f32.partialorder %v292, inf
      %v445 = vsel %vm444, %v292, %v443
      %vm446 = vcmp.eq.f32.partialorder %v292, 0.0
      %v447 = vand.u32 %v292, 2147483648
      %v448 = vsel %vm446, %v447, %v445
      %v449 = vrsqrt.pop %v295
      %v450 = vmul.f32 %v295, %v449
      %vm451 = vcmp.eq.f32.partialorder %v295, inf
      %v452 = vsel %vm451, %v295, %v450
      %vm453 = vcmp.eq.f32.partialorder %v295, 0.0
      %v454 = vand.u32 %v295, 2147483648
      %v455 = vsel %vm453, %v454, %v452
      %v456 = vrsqrt.pop %v298
      %v457 = vmul.f32 %v298, %v456
      %vm458 = vcmp.eq.f32.partialorder %v298, inf
      %v459 = vsel %vm458, %v298, %v457
      %vm460 = vcmp.eq.f32.partialorder %v298, 0.0
      %v461 = vand.u32 %v298, 2147483648
      %v462 = vsel %vm460, %v461, %v459
      %v463 = vrsqrt.pop %v301
      %v464 = vmul.f32 %v301, %v463
      %vm465 = vcmp.eq.f32.partialorder %v301, inf
      %v466 = vsel %vm465, %v301, %v464
      %vm467 = vcmp.eq.f32.partialorder %v301, 0.0
      %v468 = vand.u32 %v301, 2147483648
      %v469 = vsel %vm467, %v468, %v466
      %v470 = vrsqrt.pop %v304
      %v471 = vmul.f32 %v304, %v470
      %vm472 = vcmp.eq.f32.partialorder %v304, inf
      %v473 = vsel %vm472, %v304, %v471
      %vm474 = vcmp.eq.f32.partialorder %v304, 0.0
      %v475 = vand.u32 %v304, 2147483648
      %v476 = vsel %vm474, %v475, %v473
      %v477 = vrsqrt.pop %v307
      %v478 = vmul.f32 %v307, %v477
      %vm479 = vcmp.eq.f32.partialorder %v307, inf
      %v480 = vsel %vm479, %v307, %v478
      %vm481 = vcmp.eq.f32.partialorder %v307, 0.0
      %v482 = vand.u32 %v307, 2147483648
      %v483 = vsel %vm481, %v482, %v480
      %v484 = vrsqrt.pop %v310
      %v485 = vmul.f32 %v310, %v484
      %vm486 = vcmp.eq.f32.partialorder %v310, inf
      %v487 = vsel %vm486, %v310, %v485
      %vm488 = vcmp.eq.f32.partialorder %v310, 0.0
      %v489 = vand.u32 %v310, 2147483648
      %v490 = vsel %vm488, %v489, %v487
      %v491 = vrsqrt.pop %v313
      %v492 = vmul.f32 %v313, %v491
      %vm493 = vcmp.eq.f32.partialorder %v313, inf
      %v494 = vsel %vm493, %v313, %v492
      %vm495 = vcmp.eq.f32.partialorder %v313, 0.0
      %v496 = vand.u32 %v313, 2147483648
      %v497 = vsel %vm495, %v496, %v494
      %v498 = vrsqrt.pop %v316
      %v499 = vmul.f32 %v316, %v498
      %vm500 = vcmp.eq.f32.partialorder %v316, inf
      %v501 = vsel %vm500, %v316, %v499
      %vm502 = vcmp.eq.f32.partialorder %v316, 0.0
      %v503 = vand.u32 %v316, 2147483648
      %v504 = vsel %vm502, %v503, %v501
      %v505 = vrsqrt.pop %v319
      %v506 = vmul.f32 %v319, %v505
      %vm507 = vcmp.eq.f32.partialorder %v319, inf
      %v508 = vsel %vm507, %v319, %v506
      %vm509 = vcmp.eq.f32.partialorder %v319, 0.0
      %v510 = vand.u32 %v319, 2147483648
      %v511 = vsel %vm509, %v510, %v508
      %v512 = vrsqrt.pop %v322
      %v513 = vmul.f32 %v322, %v512
      %vm514 = vcmp.eq.f32.partialorder %v322, inf
      %v515 = vsel %vm514, %v322, %v513
      %vm516 = vcmp.eq.f32.partialorder %v322, 0.0
      %v517 = vand.u32 %v322, 2147483648
      %v518 = vsel %vm516, %v517, %v515
      %v519 = vrsqrt.pop %v325
      %v520 = vmul.f32 %v325, %v519
      %vm521 = vcmp.eq.f32.partialorder %v325, inf
      %v522 = vsel %vm521, %v325, %v520
      %vm523 = vcmp.eq.f32.partialorder %v325, 0.0
      %v524 = vand.u32 %v325, 2147483648
      %v525 = vsel %vm523, %v524, %v522
      %v526 = vrsqrt.pop %v328
      %v527 = vmul.f32 %v328, %v526
      %vm528 = vcmp.eq.f32.partialorder %v328, inf
      %v529 = vsel %vm528, %v328, %v527
      %vm530 = vcmp.eq.f32.partialorder %v328, 0.0
      %v531 = vand.u32 %v328, 2147483648
      %v532 = vsel %vm530, %v531, %v529
      %v533 = vrsqrt.pop %v331
      %v534 = vmul.f32 %v331, %v533
      %vm535 = vcmp.eq.f32.partialorder %v331, inf
      %v536 = vsel %vm535, %v331, %v534
      %vm537 = vcmp.eq.f32.partialorder %v331, 0.0
      %v538 = vand.u32 %v331, 2147483648
      %v539 = vsel %vm537, %v538, %v536
      %v540 = vrsqrt.pop %v334
      %v541 = vmul.f32 %v334, %v540
      %vm542 = vcmp.eq.f32.partialorder %v334, inf
      %v543 = vsel %vm542, %v334, %v541
      %vm544 = vcmp.eq.f32.partialorder %v334, 0.0
      %v545 = vand.u32 %v334, 2147483648
      %v546 = vsel %vm544, %v545, %v543
      %v547 = vrsqrt.pop %v337
      %v548 = vmul.f32 %v337, %v547
      %vm549 = vcmp.eq.f32.partialorder %v337, inf
      %v550 = vsel %vm549, %v337, %v548
      %vm551 = vcmp.eq.f32.partialorder %v337, 0.0
      %v552 = vand.u32 %v337, 2147483648
      %v553 = vsel %vm551, %v552, %v550
      %v554 = vrsqrt.pop %v340
      %v555 = vmul.f32 %v340, %v554
      %vm556 = vcmp.eq.f32.partialorder %v340, inf
      %v557 = vsel %vm556, %v340, %v555
      %vm558 = vcmp.eq.f32.partialorder %v340, 0.0
      %v559 = vand.u32 %v340, 2147483648
      %v560 = vsel %vm558, %v559, %v557
      %v561 = vrsqrt.pop %v343
      %v562 = vmul.f32 %v343, %v561
      %vm563 = vcmp.eq.f32.partialorder %v343, inf
      %v564 = vsel %vm563, %v343, %v562
      %vm565 = vcmp.eq.f32.partialorder %v343, 0.0
      %v566 = vand.u32 %v343, 2147483648
      %v567 = vsel %vm565, %v566, %v564
      %v568 = vadd.f32 %v350, 1e-10
      %v569 = vadd.f32 %v357, 1e-10
      %v570 = vadd.f32 %v364, 1e-10
      %v571 = vadd.f32 %v371, 1e-10
      %v572 = vadd.f32 %v378, 1e-10
      %v573 = vadd.f32 %v385, 1e-10
      %v574 = vadd.f32 %v392, 1e-10
      %v575 = vadd.f32 %v399, 1e-10
      %v576 = vadd.f32 %v406, 1e-10
      %v577 = vadd.f32 %v413, 1e-10
      %v578 = vadd.f32 %v420, 1e-10
      %v579 = vadd.f32 %v427, 1e-10
      %v580 = vadd.f32 %v434, 1e-10
      %v581 = vadd.f32 %v441, 1e-10
      %v582 = vadd.f32 %v448, 1e-10
      %v583 = vadd.f32 %v455, 1e-10
      %v584 = vadd.f32 %v462, 1e-10
      %v585 = vadd.f32 %v469, 1e-10
      %v586 = vadd.f32 %v476, 1e-10
      %v587 = vadd.f32 %v483, 1e-10
      %v588 = vadd.f32 %v490, 1e-10
      %v589 = vadd.f32 %v497, 1e-10
      %v590 = vadd.f32 %v504, 1e-10
      %v591 = vadd.f32 %v511, 1e-10
      %v592 = vadd.f32 %v518, 1e-10
      %v593 = vadd.f32 %v525, 1e-10
      %v594 = vadd.f32 %v532, 1e-10
      %v595 = vadd.f32 %v539, 1e-10
      %v596 = vadd.f32 %v546, 1e-10
      %v597 = vadd.f32 %v553, 1e-10
      %v598 = vadd.f32 %v560, 1e-10
      %v599 = vadd.f32 %v567, 1e-10
      %v600 = vrcp.pop %v568
      %v601 = vmul.f32 1.0, %v600
      %v602 = vrcp.pop %v569
      %v603 = vmul.f32 1.0, %v602
      %v604 = vrcp.pop %v570
      %v605 = vmul.f32 1.0, %v604
      %v606 = vrcp.pop %v571
      %v607 = vmul.f32 1.0, %v606
      %v608 = vrcp.pop %v572
      %v609 = vmul.f32 1.0, %v608
      %v610 = vrcp.pop %v573
      %v611 = vmul.f32 1.0, %v610
      %v612 = vrcp.pop %v574
      %v613 = vmul.f32 1.0, %v612
      %v614 = vrcp.pop %v575
      %v615 = vmul.f32 1.0, %v614
      %v616 = vrcp.pop %v576
      %v617 = vmul.f32 1.0, %v616
      %v618 = vrcp.pop %v577
      %v619 = vmul.f32 1.0, %v618
      %v620 = vrcp.pop %v578
      %v621 = vmul.f32 1.0, %v620
      %v622 = vrcp.pop %v579
      %v623 = vmul.f32 1.0, %v622
      %v624 = vrcp.pop %v580
      %v625 = vmul.f32 1.0, %v624
      %v626 = vrcp.pop %v581
      %v627 = vmul.f32 1.0, %v626
      %v628 = vrcp.pop %v582
      %v629 = vmul.f32 1.0, %v628
      %v630 = vrcp.pop %v583
      %v631 = vmul.f32 1.0, %v630
      %v632 = vrcp.pop %v584
      %v633 = vmul.f32 1.0, %v632
      %v634 = vrcp.pop %v585
      %v635 = vmul.f32 1.0, %v634
      %v636 = vrcp.pop %v586
      %v637 = vmul.f32 1.0, %v636
      %v638 = vrcp.pop %v587
      %v639 = vmul.f32 1.0, %v638
      %v640 = vrcp.pop %v588
      %v641 = vmul.f32 1.0, %v640
      %v642 = vrcp.pop %v589
      %v643 = vmul.f32 1.0, %v642
      %v644 = vrcp.pop %v590
      %v645 = vmul.f32 1.0, %v644
      %v646 = vrcp.pop %v591
      %v647 = vmul.f32 1.0, %v646
      %v648 = vrcp.pop %v592
      %v649 = vmul.f32 1.0, %v648
      %v650 = vrcp.pop %v593
      %v651 = vmul.f32 1.0, %v650
      %v652 = vrcp.pop %v594
      %v653 = vmul.f32 1.0, %v652
      %v654 = vrcp.pop %v595
      %v655 = vmul.f32 1.0, %v654
      %v656 = vrcp.pop %v596
      %v657 = vmul.f32 1.0, %v656
      %v658 = vrcp.pop %v597
      %v659 = vmul.f32 1.0, %v658
      %v660 = vrcp.pop %v598
      %v661 = vmul.f32 1.0, %v660
      %v662 = vrcp.pop %v599
      %v663 = vmul.f32 1.0, %v662
      %v664 = vmul.f32 %v183, %v601
      %v665 = vmul.f32 %v184, %v603
      %v666 = vmul.f32 %v185, %v605
      %v667 = vmul.f32 %v186, %v607
      %v668 = vmul.f32 %v187, %v609
      %v669 = vmul.f32 %v188, %v611
      %v670 = vmul.f32 %v189, %v613
      %v671 = vmul.f32 %v190, %v615
      %v672 = vmul.f32 %v191, %v617
      %v673 = vmul.f32 %v192, %v619
      %v674 = vmul.f32 %v193, %v621
      %v675 = vmul.f32 %v194, %v623
      %v676 = vmul.f32 %v195, %v625
      %v677 = vmul.f32 %v196, %v627
      %v678 = vmul.f32 %v197, %v629
      %v679 = vmul.f32 %v198, %v631
      %v680 = vmul.f32 %v199, %v633
      %v681 = vmul.f32 %v200, %v635
      %v682 = vmul.f32 %v201, %v637
      %v683 = vmul.f32 %v202, %v639
      %v684 = vmul.f32 %v203, %v641
      %v685 = vmul.f32 %v204, %v643
      %v686 = vmul.f32 %v205, %v645
      %v687 = vmul.f32 %v206, %v647
      %v688 = vmul.f32 %v207, %v649
      %v689 = vmul.f32 %v208, %v651
      %v690 = vmul.f32 %v209, %v653
      %v691 = vmul.f32 %v210, %v655
      %v692 = vmul.f32 %v211, %v657
      %v693 = vmul.f32 %v212, %v659
      %v694 = vmul.f32 %v213, %v661
      %v695 = vmul.f32 %v214, %v663
      %v696 = vld [vmem:[%s1] sm:$0x1]
      %v698 = vlaneseq
      %v699 = vshrl.u32 %v698, 7
      %v700 = vsub.s32 0, %v699
      %v701 = vrot.slane %v696, %v700
      %v703 = vmul.f32 %v664, %v701
      %v704 = vmul.f32 %v665, %v701
      %v705 = vmul.f32 %v666, %v701
      %v706 = vmul.f32 %v667, %v701
      %v707 = vmul.f32 %v668, %v701
      %v708 = vmul.f32 %v669, %v701
      %v709 = vmul.f32 %v670, %v701
      %v710 = vmul.f32 %v671, %v701
      %v711 = vmul.f32 %v672, %v701
      %v712 = vmul.f32 %v673, %v701
      %v713 = vmul.f32 %v674, %v701
      %v714 = vmul.f32 %v675, %v701
      %v715 = vmul.f32 %v676, %v701
      %v716 = vmul.f32 %v677, %v701
      %v717 = vmul.f32 %v678, %v701
      %v718 = vmul.f32 %v679, %v701
      %v719 = vmul.f32 %v680, %v701
      %v720 = vmul.f32 %v681, %v701
      %v721 = vmul.f32 %v682, %v701
      %v722 = vmul.f32 %v683, %v701
      %v723 = vmul.f32 %v684, %v701
      %v724 = vmul.f32 %v685, %v701
      %v725 = vmul.f32 %v686, %v701
      %v726 = vmul.f32 %v687, %v701
      %v727 = vmul.f32 %v688, %v701
      %v728 = vmul.f32 %v689, %v701
      %v729 = vmul.f32 %v690, %v701
      %v730 = vmul.f32 %v691, %v701
      %v731 = vmul.f32 %v692, %v701
      %v732 = vmul.f32 %v693, %v701
      %v733 = vmul.f32 %v694, %v701
      %v734 = vmul.f32 %v695, %v701
      %735 = vst.msk [vmem:[%s181] sm:$0xff] %vm247, %v703
      %736 = vst.msk [vmem:[%s181 + $0x8] sm:$0xff] %vm247, %v704
      %737 = vst.msk [vmem:[%s181 + $0x10] sm:$0xff] %vm247, %v705
      %738 = vst.msk [vmem:[%s181 + $0x18] sm:$0xff] %vm247, %v706
      %739 = vst.msk [vmem:[%s181 + $0x20] sm:$0xff] %vm247, %v707
      %740 = vst.msk [vmem:[%s181 + $0x28] sm:$0xff] %vm247, %v708
      %741 = vst.msk [vmem:[%s181 + $0x30] sm:$0xff] %vm247, %v709
      %742 = vst.msk [vmem:[%s181 + $0x38] sm:$0xff] %vm247, %v710
      %743 = vst.msk [vmem:[%s181 + $0x40] sm:$0xff] %vm247, %v711
      %744 = vst.msk [vmem:[%s181 + $0x48] sm:$0xff] %vm247, %v712
      %745 = vst.msk [vmem:[%s181 + $0x50] sm:$0xff] %vm247, %v713
      %746 = vst.msk [vmem:[%s181 + $0x58] sm:$0xff] %vm247, %v714
      %747 = vst.msk [vmem:[%s181 + $0x60] sm:$0xff] %vm247, %v715
      %748 = vst.msk [vmem:[%s181 + $0x68] sm:$0xff] %vm247, %v716
      %749 = vst.msk [vmem:[%s181 + $0x70] sm:$0xff] %vm247, %v717
      %750 = vst.msk [vmem:[%s181 + $0x78] sm:$0xff] %vm247, %v718
      %751 = vst.msk [vmem:[%s181 + $0x80] sm:$0xff] %vm247, %v719
      %752 = vst.msk [vmem:[%s181 + $0x88] sm:$0xff] %vm247, %v720
      %753 = vst.msk [vmem:[%s181 + $0x90] sm:$0xff] %vm247, %v721
      %754 = vst.msk [vmem:[%s181 + $0x98] sm:$0xff] %vm247, %v722
      %755 = vst.msk [vmem:[%s181 + $0xa0] sm:$0xff] %vm247, %v723
      %756 = vst.msk [vmem:[%s181 + $0xa8] sm:$0xff] %vm247, %v724
      %757 = vst.msk [vmem:[%s181 + $0xb0] sm:$0xff] %vm247, %v725
      %758 = vst.msk [vmem:[%s181 + $0xb8] sm:$0xff] %vm247, %v726
      %759 = vst.msk [vmem:[%s181 + $0xc0] sm:$0xff] %vm247, %v727
      %760 = vst.msk [vmem:[%s181 + $0xc8] sm:$0xff] %vm247, %v728
      %761 = vst.msk [vmem:[%s181 + $0xd0] sm:$0xff] %vm247, %v729
      %762 = vst.msk [vmem:[%s181 + $0xd8] sm:$0xff] %vm247, %v730
      %763 = vst.msk [vmem:[%s181 + $0xe0] sm:$0xff] %vm247, %v731
      %764 = vst.msk [vmem:[%s181 + $0xe8] sm:$0xff] %vm247, %v732
      %765 = vst.msk [vmem:[%s181 + $0xf0] sm:$0xff] %vm247, %v733
      %766 = vst.msk [vmem:[%s181 + $0xf8] sm:$0xff] %vm247, %v734
      %s767 = smul.u32 32, %s18
      %p768 = scmp.lt.s32.totalorder %s17, 1
      %s769 = scalar_select %p768, %s17, 1
      %p770 = scmp.lt.s32.totalorder %s767, 31
      %s771 = scalar_select %p770, %s767, 31
      %s772 = smul.addr %s769, 32
      %s773 = sadd.s32 %s771, %s772
      %s774 = smul.addr %s773, 8
      %s775 = scalar_lea.vmem %s2, %s774
      // Predicated region
      $region29: #{tpu_custom_call.1} parent=27 // pred_check
        %p776 = pneg %p94
      $region30: #{tpu_custom_call.1} parent=27 // pred_check_branch
        %778 = sbr.rel (%p776) target = $region32
      $region31: #{tpu_custom_call.1} parent=27 // pred_region
        %s779 = smul.u32 32, %s18
      $region32: #{tpu_custom_call.1} parent=27 // pred_fallthru
        _
    $region28: #{tpu_custom_call.1} parent=5 // pred_fallthru
      _
    %p780 = scmp.le.s32.totalorder 2, %s8
    // Predicated region
    $region33: #{tpu_custom_call.1} parent=5 // pred_check
      %p781 = pneg %p780
    $region34: #{tpu_custom_call.1} parent=5 // pred_check_branch
      %783 = sbr.rel (%p781) target = $region36
    $region35: #{tpu_custom_call.1} parent=5 // pred_region
      %s784 = ssub.s32 %s8, 2
      // Predicated region
      $region37: #{tpu_custom_call.1} parent=35 // pred_check
        %p785 = pneg %p100
      $region38: #{tpu_custom_call.1} parent=35 // pred_check_branch
        %787 = sbr.rel (%p785) target = $region40
      $region39: #{tpu_custom_call.1} parent=35 // pred_region
        %s788 = smul.u32 32, %s20
        %p789 = scmp.lt.s32.totalorder %s19, 1
        %s790 = scalar_select %p789, %s19, 1
        %p791 = scmp.lt.s32.totalorder %s788, 31
        %s792 = scalar_select %p791, %s788, 31
        %s793 = smul.addr %s790, 32
        %s794 = sadd.s32 %s792, %s793
        %s795 = smul.addr %s794, 8
        %s796 = scalar_lea.vmem %s2, %s795
      $region40: #{tpu_custom_call.1} parent=35 // pred_fallthru
        _
    $region36: #{tpu_custom_call.1} parent=5 // pred_fallthru
      _
  $region6: #{tpu_custom_call.1} parent=0 // loop_footer
    %s12 = sadd.s32 1, %s8
  $region7: #{tpu_custom_call.1} parent=0 // loop_footer_branch
    %7 = sbr.rel target = $region3
  $region8: #{tpu_custom_call.1} parent=0 // loop_exit
    _

</llo_original>
